<compile_context>
chip_gen: v6e
topology: v6e:2x2x1
jax: 0.10.0
libtpu: 0.0.40
codegen_flags: <defaults>
</compile_context>

<pallas_src>
import functools

import jax
import jax.numpy as jnp
from jax.experimental import pallas as pl
from jax.experimental.pallas import tpu as pltpu


def _round_up(v, mult):
    return (v + mult - 1) // mult * mult


def _cdiv(a, b):
    return (a + b - 1) // b


def _balanced_tile(dim, max_tile, align):
    """Largest aligned tile <= ~max_tile that splits `dim` into near-equal
    pieces, so padding never exceeds one alignment unit per tile."""
    n_tiles = max(1, _cdiv(dim, max_tile))
    tile = _round_up(_cdiv(dim, n_tiles), align)
    return min(tile, _round_up(dim, align))


def _linear_kernel_f32out(x_ref, w_ref, b_ref, o_ref):
    # x_ref: (tm, tk)  w_ref: (tk, tn)  b_ref: (1, tn)  o_ref: (tm, tn) f32.
    # The output block is resident across the k axis, so accumulate into it
    # directly (saves a scratch buffer and the finalize copy).
    k_idx = pl.program_id(2)

    @pl.when(k_idx == 0)
    def _init():
        o_ref[...] = jnp.zeros_like(o_ref) + b_ref[...].astype(jnp.float32)

    o_ref[...] += jnp.dot(x_ref[...], w_ref[...],
                          preferred_element_type=jnp.float32)


def _linear_kernel_acc(x_ref, w_ref, b_ref, o_ref, acc_ref):
    # Same as above, but with a f32 VMEM accumulator for narrow output dtypes.
    k_idx = pl.program_id(2)

    @pl.when(k_idx == 0)
    def _init():
        acc_ref[...] = jnp.zeros_like(acc_ref) + b_ref[...].astype(jnp.float32)

    acc_ref[...] += jnp.dot(x_ref[...], w_ref[...],
                            preferred_element_type=jnp.float32)

    @pl.when(k_idx == pl.num_programs(2) - 1)
    def _finalize():
        o_ref[...] = acc_ref[...].astype(o_ref.dtype)


@functools.partial(jax.jit, static_argnames=("compute_dtype", "tm", "tn", "tk"))
def linear_out_projection(x, weight, bias=None, *, compute_dtype=None,
                          tm=512, tn=512, tk=1024):
    """Pallas TPU implementation of torch.nn.functional.linear(x, weight, bias).

    compute_dtype: optional MXU operand dtype (e.g. jnp.bfloat16).  Accumulation
    is always f32; the output keeps x.dtype.
    """
    *lead, k = x.shape
    n, k_w = weight.shape
    assert k == k_w, (k, k_w)

    m = 1
    for d in lead:
        m *= d

    out_dtype = x.dtype
    op_dtype = jnp.dtype(compute_dtype) if compute_dtype is not None else jnp.dtype(x.dtype)

    # Balanced, aligned tiles: M sublane-aligned (16 covers bf16 packing too),
    # N / K lane-aligned (128).
    tm_eff = _balanced_tile(m, tm, 16)
    tn_eff = _balanced_tile(n, tn, 128)
    tk_eff = _balanced_tile(k, tk, 128)

    grid_m = _cdiv(m, tm_eff)
    grid_n = _cdiv(n, tn_eff)
    grid_k = _cdiv(k, tk_eff)
    m_pad, n_pad, k_pad = grid_m * tm_eff, grid_n * tn_eff, grid_k * tk_eff

    x2d = x.reshape(m, k)
    if x2d.dtype != op_dtype:
        x2d = x2d.astype(op_dtype)
    if (m_pad, k_pad) != (m, k):
        x2d = jnp.pad(x2d, ((0, m_pad - m), (0, k_pad - k)))

    # One-time wrapper transpose to (K, N): the kernel then feeds the MXU a
    # standard (tm,tk)x(tk,tn) contraction with no in-kernel weight transpose.
    wt = weight.T
    if wt.dtype != op_dtype:
        wt = wt.astype(op_dtype)
    if (k_pad, n_pad) != (k, n):
        wt = jnp.pad(wt, ((0, k_pad - k), (0, n_pad - n)))

    if bias is None:
        b2d = jnp.zeros((1, n_pad), jnp.float32)
    else:
        b2d = bias.reshape(1, n).astype(jnp.float32)
        if n_pad != n:
            b2d = jnp.pad(b2d, ((0, 0), (0, n_pad - n)))

    grid = (grid_m, grid_n, grid_k)

    # Small-M / decode regime is a pure weight stream: deepen the weight
    # pipeline so DMA latency hides behind the short per-k MXU work.
    w_spec_kwargs = {}
    if grid_m == 1 and grid_n * grid_k >= 3:
        w_spec_kwargs["pipeline_mode"] = pl.Buffered(3)
    w_spec = pl.BlockSpec((tk_eff, tn_eff), lambda i, j, kk: (kk, j),
                          **w_spec_kwargs)

    acc_into_out = jnp.dtype(out_dtype) == jnp.dtype(jnp.float32)
    kernel = _linear_kernel_f32out if acc_into_out else _linear_kernel_acc
    scratch = [] if acc_into_out else [pltpu.VMEM((tm_eff, tn_eff), jnp.float32)]

    out_itemsize = jnp.dtype(out_dtype).itemsize
    cost = pl.CostEstimate(
        flops=2 * m * n * k,
        transcendentals=0,
        bytes_accessed=(x2d.size * x2d.dtype.itemsize * grid_n      # x re-read per N tile
                        + wt.size * wt.dtype.itemsize * grid_m       # w re-read per M tile
                        + b2d.size * b2d.dtype.itemsize * grid_m
                        + m_pad * n_pad * out_itemsize),
    )

    out2d = pl.pallas_call(
        kernel,
        out_shape=jax.ShapeDtypeStruct((m_pad, n_pad), out_dtype),
        grid_spec=pltpu.PrefetchScalarGridSpec(
            num_scalar_prefetch=0,
            grid=grid,
            in_specs=[
                pl.BlockSpec((tm_eff, tk_eff), lambda i, j, kk: (i, kk)),  # x tile
                w_spec,                                                    # W^T tile (K, N)
                pl.BlockSpec((1, tn_eff), lambda i, j, kk: (0, j)),        # bias tile
            ],
            out_specs=pl.BlockSpec((tm_eff, tn_eff), lambda i, j, kk: (i, j)),
            scratch_shapes=scratch,
        ),
        compiler_params=pltpu.CompilerParams(
            # K reduction last + "arbitrary"; M/N "parallel" for megacore /
            # v7x 2-TC sharding.  TODO(synk): on v7x, verify both TCs are
            # active; if not, switch the leading axis to pltpu.CORE_PARALLEL.
            dimension_semantics=("parallel", "parallel", "arbitrary"),
            # Tiles use ~12-20 MiB; 48 MiB keeps headroom on v7x's 64 MiB VMEM
            # and is an explicit raise above v5e's 16 MiB scoped default.
            vmem_limit_bytes=48 * 1024 * 1024,
        ),
        cost_estimate=cost,
    )(x2d, wt, b2d)

    return out2d[:m, :n].reshape(*lead, n)


if __name__ == "__main__":
    # Deterministic parameter / input construction.
    key = jax.random.PRNGKey(0)
    k_x, k_w, k_b = jax.random.split(key, 3)

    batch, seq, in_features, out_features = 2, 8, 32, 64
    x = jax.random.normal(k_x, (batch, seq, in_features), dtype=jnp.float32)
    weight = jax.random.normal(k_w, (out_features, in_features), dtype=jnp.float32) * 0.05
    bias = jax.random.normal(k_b, (out_features,), dtype=jnp.float32) * 0.1

    y_ref = x @ weight.T + bias

    # 1) f32 path (matches torch.nn.functional.linear semantics).
    y = jax.block_until_ready(linear_out_projection(x, weight, bias))
    assert y.shape == (batch, seq, out_features), y.shape
    assert jnp.allclose(y, y_ref, atol=2e-5, rtol=2e-5), "mismatch vs reference (f32)"

    # 2) Shapes not divisible by the tiles (balanced-tile / padding path).
    x2 = jax.random.normal(k_x, (3, 5, in_features), dtype=jnp.float32)
    y2 = jax.block_until_ready(linear_out_projection(x2, weight, bias))
    assert jnp.allclose(y2, x2 @ weight.T + bias, atol=2e-5, rtol=2e-5), \
        "mismatch vs reference (padded)"

    # 3) bf16 MXU operands + f32 accumulation (fast path on all TPU gens).
    y3 = jax.block_until_ready(
        linear_out_projection(x, weight, bias, compute_dtype=jnp.bfloat16))
    assert y3.dtype == jnp.float32
    assert jnp.allclose(y3, y_ref, atol=3e-2, rtol=3e-2), "mismatch vs reference (bf16 compute)"

    # 4) bf16 in / bf16 out exercises the f32-scratch accumulator kernel.
    y4 = jax.block_until_ready(
        linear_out_projection(x.astype(jnp.bfloat16), weight.astype(jnp.bfloat16),
                              bias.astype(jnp.bfloat16)))
    assert y4.dtype == jnp.bfloat16
    assert jnp.allclose(y4.astype(jnp.float32), y_ref, atol=3e-2, rtol=3e-2), \
        "mismatch vs reference (bf16 io)"

    # 5) bias=None (supported by torch.nn.functional.linear).
    y5 = jax.block_until_ready(linear_out_projection(x, weight, None))
    assert jnp.allclose(y5, x @ weight.T, atol=2e-5, rtol=2e-5), "mismatch vs reference (no bias)"

    print("KERNEL_OK")
</pallas_src>

<mosaic_0001>
module attributes {stable_mosaic.version = 11 : i64} {
  func.func @_linear_kernel_f32out(%arg0: i32, %arg1: i32, %arg2: i32, %arg3: memref<16x128xf32, #tpu.memory_space<vmem>>, %arg4: memref<128x128xf32, #tpu.memory_space<vmem>>, %arg5: memref<1x128xf32, #tpu.memory_space<vmem>>, %arg6: memref<16x128xf32, #tpu.memory_space<vmem>>) attributes {dimension_semantics = [#tpu.dimension_semantics<parallel>, #tpu.dimension_semantics<parallel>, #tpu.dimension_semantics<arbitrary>], iteration_bounds = array<i64: 1, 1, 1>, scalar_prefetch = 0 : i64, scratch_operands = 0 : i64, tpu.core_type = #tpu.core_type<tc>, window_params = [{transform_indices = @transform_0, window_bounds = array<i64: 16, 128>}, {transform_indices = @transform_1, window_bounds = array<i64: 128, 128>}, {transform_indices = @transform_2, window_bounds = array<i64: 1, 128>}, {transform_indices = @transform_3, window_bounds = array<i64: 16, 128>}]} {
    %c0_i32 = arith.constant 0 : i32
    %0 = arith.cmpi eq, %arg2, %c0_i32 : i32
    %1 = arith.extui %0 : i1 to i32
    %c0_i32_0 = arith.constant 0 : i32
    %2 = arith.cmpi ne, %1, %c0_i32_0 : i32
    scf.if %2 {
      %cst_8 = arith.constant 0.000000e+00 : f32
      %9 = vector.broadcast %cst_8 : f32 to vector<16x128xf32>
      %c0_9 = arith.constant 0 : index
      %c0_10 = arith.constant 0 : index
      %10 = vector.load %arg5[%c0_9, %c0_10] : memref<1x128xf32, #tpu.memory_space<vmem>>, vector<1x128xf32>
      %11 = vector.broadcast %10 : vector<1x128xf32> to vector<16x128xf32>
      %12 = arith.addf %9, %11 : vector<16x128xf32>
      %c0_11 = arith.constant 0 : index
      %c0_12 = arith.constant 0 : index
      %13 = vector.load %arg6[%c0_11, %c0_12] : memref<16x128xf32, #tpu.memory_space<vmem>>, vector<16x128xf32>
      tpu.vector_store %arg6[%c0_11, %c0_12], %12 {strides = array<i32>} : memref<16x128xf32, #tpu.memory_space<vmem>>, vector<16x128xf32>,
    } else {
    }
    %c0 = arith.constant 0 : index
    %c0_1 = arith.constant 0 : index
    %3 = vector.load %arg6[%c0, %c0_1] : memref<16x128xf32, #tpu.memory_space<vmem>>, vector<16x128xf32>
    %c0_2 = arith.constant 0 : index
    %c0_3 = arith.constant 0 : index
    %4 = vector.load %arg3[%c0_2, %c0_3] : memref<16x128xf32, #tpu.memory_space<vmem>>, vector<16x128xf32>
    %c0_4 = arith.constant 0 : index
    %c0_5 = arith.constant 0 : index
    %5 = vector.load %arg4[%c0_4, %c0_5] : memref<128x128xf32, #tpu.memory_space<vmem>>, vector<128x128xf32>
    %cst = arith.constant dense<0.000000e+00> : vector<16x128xf32>
    %6 = tpu.matmul %4, %5, %cst {dimension_numbers = #tpu.dot_dimension_numbers<[1], [0], [0], [1], [0, 0, 1, 1], [], []>} : vector<16x128xf32>, vector<128x128xf32>, vector<16x128xf32> -> vector<16x128xf32>
    %7 = arith.addf %3, %6 : vector<16x128xf32>
    %c0_6 = arith.constant 0 : index
    %c0_7 = arith.constant 0 : index
    %8 = vector.load %arg6[%c0_6, %c0_7] : memref<16x128xf32, #tpu.memory_space<vmem>>, vector<16x128xf32>
    tpu.vector_store %arg6[%c0_6, %c0_7], %7 {strides = array<i32>} : memref<16x128xf32, #tpu.memory_space<vmem>>, vector<16x128xf32>,
    return
  }
  func.func @transform_0(%arg0: i32, %arg1: i32, %arg2: i32) -> (i32, i32) {
    %c0_i32 = arith.constant 0 : i32
    return %arg0, %arg2 : i32, i32
  }
  func.func @transform_1(%arg0: i32, %arg1: i32, %arg2: i32) -> (i32, i32) {
    %c0_i32 = arith.constant 0 : i32
    return %arg2, %arg1 : i32, i32
  }
  func.func @transform_2(%arg0: i32, %arg1: i32, %arg2: i32) -> (i32, i32) {
    %c0_i32 = arith.constant 0 : i32
    %c0_i32_0 = arith.constant 0 : i32
    return %c0_i32, %arg1 : i32, i32
  }
  func.func @transform_3(%arg0: i32, %arg1: i32, %arg2: i32) -> (i32, i32) {
    %c0_i32 = arith.constant 0 : i32
    return %arg0, %arg1 : i32, i32
  }
}

</mosaic_0001>

<llo_original>
// kernel: linear_out_projection.1
$region0: #{linear_out_projection.1}
  #allocation0 [shape = 'u32[]', space=smem, size = 0x4, offset = 0x4, fixed_abs, tag = 'smem constant byte address 0x4 - core index']
  #allocation1 [shape = 'u32[144,128]{1,0:T(1,128)}', space=vmem, size = 0x12000, scoped, tag = 'internal scratch']
  %s0 = inlined_call_operand.vmem [shape: f32[16,128], index: 0, kind: input, shape index: {}]
  %s1 = inlined_call_operand.vmem [shape: f32[128,128], index: 1, kind: input, shape index: {}]
  %s2 = inlined_call_operand.vmem [shape: f32[1,128], index: 2, kind: input, shape index: {}]
  %s3 = inlined_call_operand.vmem [shape: f32[16,128], index: 3, kind: output, shape index: {}]
  %s4 = sld [smem:[#allocation0]]
  $region26: #{linear_out_projection.1} parent=0
    _
  %s6 = ssub.s32 1, %s4
  %s7 = scalar_select 0, %s6, %s4
  // Predicated region
  $region2: #{linear_out_projection.1} parent=0 // pred_check
    _
  $region3: #{linear_out_projection.1} parent=0 // pred_check_branch
    %9 = sbr.rel (0) target = $region5
  $region4: #{linear_out_projection.1} parent=0 // pred_region
    _
  $region5: #{linear_out_projection.1} parent=0 // pred_fallthru
    _
  // Predicated region
  $region6: #{linear_out_projection.1} parent=0 // pred_check
    _
  $region7: #{linear_out_projection.1} parent=0 // pred_check_branch
    %11 = sbr.rel (0) target = $region9
  $region8: #{linear_out_projection.1} parent=0 // pred_region
    _
  $region9: #{linear_out_projection.1} parent=0 // pred_fallthru
    _
  // Predicated region
  $region10: #{linear_out_projection.1} parent=0 // pred_check
    _
  $region11: #{linear_out_projection.1} parent=0 // pred_check_branch
    %13 = sbr.rel (0) target = $region13
  $region12: #{linear_out_projection.1} parent=0 // pred_region
    _
  $region13: #{linear_out_projection.1} parent=0 // pred_fallthru
    _
  %p14 = scmp.eq.s32.totalorder 0, 0
  // Predicated region
  $region14: #{linear_out_projection.1} parent=0 // pred_check
    %p15 = pneg %p14
  $region15: #{linear_out_projection.1} parent=0 // pred_check_branch
    %17 = sbr.rel (%p15) target = $region17
  $region16: #{linear_out_projection.1} parent=0 // pred_region
    %v18 = vld [vmem:[%s2] sm:$0x1]
    %v20 = vlaneseq
    %v21 = vshrl.u32 %v20, 7
    %v22 = vsub.s32 0, %v21
    %v23 = vrot.slane %v18, %v22
    %v25 = vadd.f32 %v23, 0.0
    %26 = vst [vmem:[%s3] sm:$0xff] %v25
    %27 = vst [vmem:[%s3 + $0x8] sm:$0xff] %v25
  $region17: #{linear_out_projection.1} parent=0 // pred_fallthru
    _
  %v28 = vld [vmem:[%s3] sm:$0xff]
  %v29 = vld [vmem:[%s3 + $0x8] sm:$0xff]
  %v30 = vld [vmem:[%s0] sm:$0xff]
  %v31 = vld [vmem:[%s0 + $0x8] sm:$0xff]
  %v32 = vld [vmem:[%s1] sm:$0xff]
  %v33 = vld [vmem:[%s1 + $0x8] sm:$0xff]
  %v34 = vld [vmem:[%s1 + $0x10] sm:$0xff]
  %v35 = vld [vmem:[%s1 + $0x18] sm:$0xff]
  %v36 = vld [vmem:[%s1 + $0x20] sm:$0xff]
  %v37 = vld [vmem:[%s1 + $0x28] sm:$0xff]
  %v38 = vld [vmem:[%s1 + $0x30] sm:$0xff]
  %v39 = vld [vmem:[%s1 + $0x38] sm:$0xff]
  %v40 = vld [vmem:[%s1 + $0x40] sm:$0xff]
  %v41 = vld [vmem:[%s1 + $0x48] sm:$0xff]
  %v42 = vld [vmem:[%s1 + $0x50] sm:$0xff]
  %v43 = vld [vmem:[%s1 + $0x58] sm:$0xff]
  %v44 = vld [vmem:[%s1 + $0x60] sm:$0xff]
  %v45 = vld [vmem:[%s1 + $0x68] sm:$0xff]
  %v46 = vld [vmem:[%s1 + $0x70] sm:$0xff]
  %v47 = vld [vmem:[%s1 + $0x78] sm:$0xff]
  %48 = vmatprep.subr.mxu0 0.0
  %49 = vmatpush1.msra.mxu0 %v47
  %50 = vmatprep.subr.mxu0 0.0
  %51 = vmatpush1.msra.mxu0 %v46
  %52 = vmatprep.subr.mxu0 0.0
  %53 = vmatpush1.msra.mxu0 %v45
  %54 = vmatprep.subr.mxu0 0.0
  %55 = vmatpush1.msra.mxu0 %v44
  %56 = vmatprep.subr.mxu0 0.0
  %57 = vmatpush1.msra.mxu0 %v43
  %58 = vmatprep.subr.mxu0 0.0
  %59 = vmatpush1.msra.mxu0 %v42
  %60 = vmatprep.subr.mxu0 0.0
  %61 = vmatpush1.msra.mxu0 %v41
  %62 = vmatprep.subr.mxu0 0.0
  %63 = vmatpush1.msra.mxu0 %v40
  %64 = vmatprep.subr.mxu0 0.0
  %65 = vmatpush1.msra.mxu0 %v39
  %66 = vmatprep.subr.mxu0 0.0
  %67 = vmatpush1.msra.mxu0 %v38
  %68 = vmatprep.subr.mxu0 0.0
  %69 = vmatpush1.msra.mxu0 %v37
  %70 = vmatprep.subr.mxu0 0.0
  %71 = vmatpush1.msra.mxu0 %v36
  %72 = vmatprep.subr.mxu0 0.0
  %73 = vmatpush1.msra.mxu0 %v35
  %74 = vmatprep.subr.mxu0 0.0
  %75 = vmatpush1.msra.mxu0 %v34
  %76 = vmatprep.subr.mxu0 0.0
  %77 = vmatpush1.msra.mxu0 %v33
  %78 = vmatprep.subr.mxu0 0.0
  %79 = vmatpush1.msra.mxu0 %v32
  %80 = vmatprep.subr.mxu0 0.0
  %81 = vmatpush2.msra.mxu0 0.0
  %82 = vmatprep.subr.mxu0 0.0
  %83 = vmatpush2.msra.mxu0 0.0
  %84 = vmatprep.subr.mxu0 0.0
  %85 = vmatpush2.msra.mxu0 0.0
  %86 = vmatprep.subr.mxu0 0.0
  %87 = vmatpush2.msra.mxu0 0.0
  %88 = vmatprep.subr.mxu0 0.0
  %89 = vmatpush2.msra.mxu0 0.0
  %90 = vmatprep.subr.mxu0 0.0
  %91 = vmatpush2.msra.mxu0 0.0
  %92 = vmatprep.subr.mxu0 0.0
  %93 = vmatpush2.msra.mxu0 0.0
  %94 = vmatprep.subr.mxu0 0.0
  %95 = vmatpush2.msra.mxu0 0.0
  %96 = vmatprep.subr.mxu0 0.0
  %97 = vmatpush2.msra.mxu0 0.0
  %98 = vmatprep.subr.mxu0 0.0
  %99 = vmatpush2.msra.mxu0 0.0
  %100 = vmatprep.subr.mxu0 0.0
  %101 = vmatpush2.msra.mxu0 0.0
  %102 = vmatprep.subr.mxu0 0.0
  %103 = vmatpush2.msra.mxu0 0.0
  %104 = vmatprep.subr.mxu0 0.0
  %105 = vmatpush2.msra.mxu0 0.0
  %106 = vmatprep.subr.mxu0 0.0
  %107 = vmatpush2.msra.mxu0 0.0
  %108 = vmatprep.subr.mxu0 0.0
  %109 = vmatpush2.msra.mxu0 0.0
  %110 = vmatprep.subr.mxu0 0.0
  %111 = vmatpush2.msra.mxu0 0.0
  %112 = vmatprep.mubr.f32.mxu0 0.0
  %113 = vmatmul.mubr.f32.gmra.mxu0 %v30
  %v114 = vpop.f32.mrf.mxu0
  %v115 = vadd.f32 0.0, %v114
  %v116 = vpop.f32.mrf.mxu0
  %117 = vmatprep.mubr.f32.mxu0 0.0
  %118 = vmatmul.mubr.f32.gmra.mxu0 %v31
  %v119 = vpop.f32.mrf.mxu0
  %v120 = vadd.f32 0.0, %v119
  %v121 = vpop.f32.mrf.mxu0
  %122 = vdwg.mxu0
  %v123 = vadd.f32 %v28, %v115
  %v124 = vadd.f32 %v29, %v120
  %125 = vst [vmem:[%s3] sm:$0xff] %v123
  %126 = vst [vmem:[%s3 + $0x8] sm:$0xff] %v124
  // Predicated region
  $region18: #{linear_out_projection.1} parent=0 // pred_check
    _
  $region19: #{linear_out_projection.1} parent=0 // pred_check_branch
    %128 = sbr.rel (0) target = $region21
  $region20: #{linear_out_projection.1} parent=0 // pred_region
    _
  $region21: #{linear_out_projection.1} parent=0 // pred_fallthru
    _
  // Predicated region
  $region22: #{linear_out_projection.1} parent=0 // pred_check
    _
  $region23: #{linear_out_projection.1} parent=0 // pred_check_branch
    %130 = sbr.rel (0) target = $region25
  $region24: #{linear_out_projection.1} parent=0 // pred_region
    _
  $region25: #{linear_out_projection.1} parent=0 // pred_fallthru
    _

</llo_original>
